<compile_context>
chip_gen: v5e
topology: v5e:2x2
jax: 0.10.0
libtpu: 0.0.40
codegen_flags: <defaults>
</compile_context>

<pallas_src>
import jax
import jax.numpy as jnp
from jax.experimental import pallas as pl
from jax.experimental.pallas import tpu as pltpu

LANES = 128


def _msle_partial_kernel(pred_ref, actual_ref, out_ref):
    """Accumulate per-(sublane, lane) partial sums of squared log1p diffs.

    out_ref is an (8, LANES) f32 output block whose block index is constant
    along the inner (reduction) grid axis, so it stays resident in VMEM and
    acts as the accumulator.
    """

    @pl.when(pl.program_id(1) == 0)
    def _():
        out_ref[...] = jnp.zeros_like(out_ref)

    # Upcast inside the kernel (inputs may be bf16/f16); clamp matches
    # `pred[pred < 0] = 0` from the PyTorch module.
    p = jnp.maximum(pred_ref[...].astype(jnp.float32), 0.0)
    a = actual_ref[...].astype(jnp.float32)
    d = jnp.log1p(p) - jnp.log1p(a)
    sq = d * d
    # (tile_rows, 128) -> (tile_rows//8, 8, 128): pure VPU adds (no XLU).
    out_ref[...] += sq.reshape(-1, 8, LANES).sum(axis=0)


def _as_supported(x):
    if x.dtype in (jnp.float32, jnp.bfloat16, jnp.float16):
        return x
    return x.astype(jnp.float32)


def msle_loss(pred: jax.Array, actual: jax.Array, *,
              target_tile_bytes: int = 4 * 1024 * 1024,
              num_splits: int = 2) -> jax.Array:
    """MSLE loss = mean((log1p(max(pred,0)) - log1p(actual))**2)."""
    assert pred.shape == actual.shape
    total = int(pred.size)

    pred = _as_supported(pred)
    actual = _as_supported(actual)

    itemsize_max = max(pred.dtype.itemsize, actual.dtype.itemsize)
    itemsize_min = min(pred.dtype.itemsize, actual.dtype.itemsize)
    # Sublane alignment for the narrowest streamed dtype (8 for f32, 16 bf16).
    row_align = 8 * max(1, 4 // itemsize_min)

    # Flattened row count (lane width fixed at 128), split across the outer
    # parallel axis, rounded up to the alignment.
    rows_total = -(-total // LANES)
    rows_per_split = -(-rows_total // num_splits)
    rows_per_split = -(-rows_per_split // row_align) * row_align

    # Multi-MiB tiles: per-step pipeline overhead (~0.35 us) must be amortized.
    tile_rows = max(row_align,
                    (target_tile_bytes // (LANES * itemsize_max))
                    // row_align * row_align)
    tile_rows = min(tile_rows, rows_per_split)

    tiles_per_split = -(-rows_per_split // tile_rows)
    padded_rows = num_splits * tiles_per_split * tile_rows
    padded_total = padded_rows * LANES

    def _prep(x):
        flat = x.reshape(-1)
        if padded_total != total:
            # Zero padding contributes exactly 0: log1p(0) - log1p(0) = 0.
            flat = jnp.pad(flat, (0, padded_total - total))
        return flat.reshape(padded_rows, LANES)

    p2 = _prep(pred)
    a2 = _prep(actual)

    # VMEM budget: 2 inputs x 2 pipeline buffers x tile + small slack.
    tile_bytes = tile_rows * LANES * itemsize_max
    vmem_limit = int(min(max(4 * tile_bytes + (4 << 20), 16 << 20), 48 << 20))

    in_map = lambda c, i: (c * tiles_per_split + i, 0)

    partials = pl.pallas_call(
        _msle_partial_kernel,
        out_shape=jax.ShapeDtypeStruct((num_splits * 8, LANES), jnp.float32),
        grid=(num_splits, tiles_per_split),
        in_specs=[
            pl.BlockSpec((tile_rows, LANES), in_map),
            pl.BlockSpec((tile_rows, LANES), in_map),
        ],
        out_specs=pl.BlockSpec((8, LANES), lambda c, i: (c, 0)),
        compiler_params=pltpu.CompilerParams(
            dimension_semantics=("parallel", "arbitrary"),
            vmem_limit_bytes=vmem_limit,
        ),
    )(p2, a2)

    # Tiny epilogue: single cross-lane/sublane reduce + mean, done in XLA.
    return jnp.sum(partials) / jnp.float32(total)


def msle_loss_ref(pred, actual):
    p = jnp.maximum(pred.astype(jnp.float32), 0.0)
    a = actual.astype(jnp.float32)
    return jnp.mean((jnp.log1p(p) - jnp.log1p(a)) ** 2)


if __name__ == "__main__":
    key = jax.random.PRNGKey(0)
    k1, k2 = jax.random.split(key)

    # Small f32 case (pred contains negatives that get clamped).
    N, D = 32, 128
    pred = jax.random.normal(k1, (N, D), dtype=jnp.float32) * 2.0
    actual = jax.random.uniform(k2, (N, D), dtype=jnp.float32,
                                minval=0.0, maxval=5.0)

    loss = msle_loss(pred, actual)
    jax.block_until_ready(loss)
    ref = msle_loss_ref(pred, actual)
    assert jnp.allclose(loss, ref, rtol=1e-5, atol=1e-6), (loss, ref)

    # bf16 inputs with an awkward shape (exercises padding + in-kernel upcast).
    predb = (jax.random.normal(k1, (37, 50), dtype=jnp.float32) * 2.0
             ).astype(jnp.bfloat16)
    actb = jax.random.uniform(k2, (37, 50), dtype=jnp.float32,
                              minval=0.0, maxval=5.0).astype(jnp.bfloat16)
    lossb = msle_loss(predb, actb)
    jax.block_until_ready(lossb)
    refb = msle_loss_ref(predb, actb)
    assert jnp.allclose(lossb, refb, rtol=1e-4, atol=1e-5), (lossb, refb)

    print("KERNEL_OK")
</pallas_src>

<mosaic_0001>
module attributes {stable_mosaic.version = 11 : i64} {
  func.func @_msle_partial_kernel(%arg0: i32, %arg1: i32, %arg2: memref<16x128xf32, #tpu.memory_space<vmem>>, %arg3: memref<16x128xf32, #tpu.memory_space<vmem>>, %arg4: memref<8x128xf32, #tpu.memory_space<vmem>>) attributes {dimension_semantics = [#tpu.dimension_semantics<parallel>, #tpu.dimension_semantics<arbitrary>], iteration_bounds = array<i64: 2, 1>, scalar_prefetch = 0 : i64, scratch_operands = 0 : i64, tpu.core_type = #tpu.core_type<tc>, window_params = [{transform_indices = @transform_0, window_bounds = array<i64: 16, 128>}, {transform_indices = @transform_1, window_bounds = array<i64: 16, 128>}, {transform_indices = @transform_2, window_bounds = array<i64: 8, 128>}]} {
    %c0_i32 = arith.constant 0 : i32
    %0 = arith.cmpi eq, %arg1, %c0_i32 : i32
    %1 = arith.extui %0 : i1 to i32
    %c0_i32_0 = arith.constant 0 : i32
    %2 = arith.cmpi ne, %1, %c0_i32_0 : i32
    scf.if %2 {
      %cst_9 = arith.constant 0.000000e+00 : f32
      %16 = vector.broadcast %cst_9 : f32 to vector<8x128xf32>
      %c0_10 = arith.constant 0 : index
      %c0_11 = arith.constant 0 : index
      %17 = vector.load %arg4[%c0_10, %c0_11] : memref<8x128xf32, #tpu.memory_space<vmem>>, vector<8x128xf32>
      tpu.vector_store %arg4[%c0_10, %c0_11], %16 {strides = array<i32>} : memref<8x128xf32, #tpu.memory_space<vmem>>, vector<8x128xf32>,
    } else {
    }
    %c0 = arith.constant 0 : index
    %c0_1 = arith.constant 0 : index
    %3 = vector.load %arg2[%c0, %c0_1] : memref<16x128xf32, #tpu.memory_space<vmem>>, vector<16x128xf32>
    %cst = arith.constant 0.000000e+00 : f32
    %4 = vector.broadcast %cst : f32 to vector<16x128xf32>
    %5 = arith.maximumf %3, %4 : vector<16x128xf32>
    %c0_2 = arith.constant 0 : index
    %c0_3 = arith.constant 0 : index
    %6 = vector.load %arg3[%c0_2, %c0_3] : memref<16x128xf32, #tpu.memory_space<vmem>>, vector<16x128xf32>
    %7 = math.log1p %5 : vector<16x128xf32>
    %8 = math.log1p %6 : vector<16x128xf32>
    %9 = arith.subf %7, %8 : vector<16x128xf32>
    %10 = arith.mulf %9, %9 : vector<16x128xf32>
    %c0_4 = arith.constant 0 : index
    %c0_5 = arith.constant 0 : index
    %11 = vector.load %arg4[%c0_4, %c0_5] : memref<8x128xf32, #tpu.memory_space<vmem>>, vector<8x128xf32>
    %12 = vector.shape_cast %10 : vector<16x128xf32> to vector<2x8x128xf32>
    %cst_6 = arith.constant dense<0.000000e+00> : vector<8x128xf32>
    %13 = vector.multi_reduction <add>, %12, %cst_6 [0] : vector<2x8x128xf32> to vector<8x128xf32>
    %14 = arith.addf %11, %13 : vector<8x128xf32>
    %c0_7 = arith.constant 0 : index
    %c0_8 = arith.constant 0 : index
    %15 = vector.load %arg4[%c0_7, %c0_8] : memref<8x128xf32, #tpu.memory_space<vmem>>, vector<8x128xf32>
    tpu.vector_store %arg4[%c0_7, %c0_8], %14 {strides = array<i32>} : memref<8x128xf32, #tpu.memory_space<vmem>>, vector<8x128xf32>,
    return
  }
  func.func @transform_0(%arg0: i32, %arg1: i32) -> (i32, i32) {
    %c1_i32 = arith.constant 1 : i32
    %0 = arith.muli %arg0, %c1_i32 : i32
    %1 = arith.addi %0, %arg1 : i32
    %c0_i32 = arith.constant 0 : i32
    %c0_i32_0 = arith.constant 0 : i32
    return %1, %c0_i32 : i32, i32
  }
  func.func @transform_1(%arg0: i32, %arg1: i32) -> (i32, i32) {
    %c1_i32 = arith.constant 1 : i32
    %0 = arith.muli %arg0, %c1_i32 : i32
    %1 = arith.addi %0, %arg1 : i32
    %c0_i32 = arith.constant 0 : i32
    %c0_i32_0 = arith.constant 0 : i32
    return %1, %c0_i32 : i32, i32
  }
  func.func @transform_2(%arg0: i32, %arg1: i32) -> (i32, i32) {
    %c0_i32 = arith.constant 0 : i32
    %c0_i32_0 = arith.constant 0 : i32
    return %arg0, %c0_i32 : i32, i32
  }
}

</mosaic_0001>

<llo_original>
// kernel: tpu_custom_call.1
$region0: #{tpu_custom_call.1}
  #allocation0 [shape = 'u32[]', space=smem, size = 0x4, offset = 0x4, fixed_abs, tag = 'smem constant byte address 0x4 - core index']
  #allocation1 [shape = 'u32[72,128]{1,0:T(1,128)}', space=vmem, size = 0x9000, scoped, tag = 'internal scratch']
  %s0 = inlined_call_operand.hbm [shape: f32[32,128], index: 0, kind: input, shape index: {}]
  %s1 = inlined_call_operand.hbm [shape: f32[32,128], index: 1, kind: input, shape index: {}]
  %s2 = inlined_call_operand.hbm [shape: f32[16,128], index: 2, kind: output, shape index: {}]
  %s3 = sld [smem:[#allocation0]]
  $region53: #{tpu_custom_call.1} parent=0
    _
  %s5 = ssub.s32 1, %s3
  %s6 = scalar_select 0, %s5, %s3
  $region1: #{tpu_custom_call.1} parent=0
    #allocation2 [shape = 'u8[16384]{0}', space=vmem, size = 0x4000, scoped, tag = 'input window, operand 0']
    #allocation3 [shape = 's32[2]{0}', space=sflag, size = 0x8, scoped, tag = 'scoped memory for tpu_custom_call.1']
    #allocation4 [shape = 's32[2]{0}', space=sflag, size = 0x8, scoped, tag = 'scoped memory for tpu_custom_call.1']
    #allocation5 [shape = 'u8[16384]{0}', space=vmem, size = 0x4000, scoped, tag = 'input window, operand 1']
    #allocation6 [shape = 's32[2]{0}', space=sflag, size = 0x8, scoped, tag = 'scoped memory for tpu_custom_call.1']
    #allocation7 [shape = 'u8[8192]{0}', space=vmem, size = 0x2000, scoped, tag = 'output window, operand 0']
    %7 = vsyncpa [#allocation3], 0
    %s8 = scalar_lea.sflag [#allocation3], 1
    %9 = vsyncpa %s8, 0
    %10 = vsyncpa [#allocation6], 0
    %s11 = scalar_lea.sflag [#allocation6], 1
    %12 = vsyncpa %s11, 0
    %13 = vsyncpa [#allocation4], 0
    %s14 = scalar_lea.sflag [#allocation4], 1
    %15 = vsyncpa %s14, 0
    loop: start=0, step=1, limit=4
    $region2: #{tpu_custom_call.1} parent=1 // loop_pre_header
      _
    $region3: #{tpu_custom_call.1} parent=1 // loop_header
      %s17 = sphi 0, %s21
      %p18 = scmp.ge.s32.totalorder %s17, 4
      %s24 = sphi 0, %s36
      %s25 = sphi 0, %s32
      %s26 = sphi 0, %s24
      %s27 = sphi 0, %s25
      %s28 = sphi 0, %s26
      %s29 = sphi 0, %s27
      %s41 = sphi 0, %s43
      %s44 = sphi 0, %s41
      %s45 = sphi 0, %s44
      %s61 = sphi 0, %s45
      %s69 = sphi 0, %s71
      %s72 = sphi 0, %s69
      %s73 = sphi 0, %s72
      %s89 = sphi 0, %s73
      %s95 = sphi 0, %s97
      %s98 = sphi 0, %s95
      %s99 = sphi 0, %s98
      %s115 = sphi 0, %s99
    $region4: #{tpu_custom_call.1} parent=1 // loop_header_branch
      %20 = sbr.rel (%p18) target = $region8
    $region5: #{tpu_custom_call.1} parent=1 // loop_body
      %s22 = ssub.s32 %s17, 1
      %s23 = ssub.s32 %s17, 2
      %s30 = sadd.s32 1, %s25
      %p31 = scmp.ge.s32.totalorder %s30, 1
      %s32 = scalar_select %p31, 0, %s30
      %s33 = sadd.s32 1, %s24
      %s34 = scalar_select %p31, %s33, %s24
      %p35 = scmp.ge.s32.totalorder %s34, 2
      %s36 = scalar_select %p35, 0, %s34
      %s37 = sadd.s32 %s24, %s25
      %s38 = sadd.s32 %s36, %s32
      %s39 = ssub.s32 %s37, %s38
      %p40 = scmp.eq.s32.totalorder %s39, 0
      %s42 = sadd.s32 %s41, 1
      %s43 = scalar_select %p40, %s41, %s42
      %p46 = pneg %p40
      %p47 = scmp.eq.s32.totalorder %s17, 1
      %p48 = por %p46, %p47
      %p49 = scmp.ne.s32.totalorder %s41, %s44
      %p50 = scmp.eq.s32.totalorder %s17, 0
      %p51 = por %p49, %p50
      %p52 = scmp.ne.s32.totalorder %s41, %s44
      %p53 = scmp.eq.s32.totalorder %s22, 1
      %p54 = por %p52, %p53
      %p55 = scmp.ne.s32.totalorder %s44, %s45
      %p56 = scmp.eq.s32.totalorder %s22, 0
      %p57 = por %p55, %p56
      %p58 = scmp.ne.s32.totalorder %s44, %s45
      %p59 = scmp.eq.s32.totalorder %s23, 1
      %p60 = por %p58, %p59
      %p62 = scmp.ne.s32.totalorder %s45, %s61
      %p63 = scmp.eq.s32.totalorder %s23, 0
      %p64 = por %p62, %p63
      %s65 = sadd.s32 %s24, %s25
      %s66 = sadd.s32 %s36, %s32
      %s67 = ssub.s32 %s65, %s66
      %p68 = scmp.eq.s32.totalorder %s67, 0
      %s70 = sadd.s32 %s69, 1
      %s71 = scalar_select %p68, %s69, %s70
      %p74 = pneg %p68
      %p75 = scmp.eq.s32.totalorder %s17, 1
      %p76 = por %p74, %p75
      %p77 = scmp.ne.s32.totalorder %s69, %s72
      %p78 = scmp.eq.s32.totalorder %s17, 0
      %p79 = por %p77, %p78
      %p80 = scmp.ne.s32.totalorder %s69, %s72
      %p81 = scmp.eq.s32.totalorder %s22, 1
      %p82 = por %p80, %p81
      %p83 = scmp.ne.s32.totalorder %s72, %s73
      %p84 = scmp.eq.s32.totalorder %s22, 0
      %p85 = por %p83, %p84
      %p86 = scmp.ne.s32.totalorder %s72, %s73
      %p87 = scmp.eq.s32.totalorder %s23, 1
      %p88 = por %p86, %p87
      %p90 = scmp.ne.s32.totalorder %s73, %s89
      %p91 = scmp.eq.s32.totalorder %s23, 0
      %p92 = por %p90, %p91
      %s93 = ssub.s32 %s24, %s36
      %p94 = scmp.eq.s32.totalorder %s93, 0
      %s96 = sadd.s32 %s95, 1
      %s97 = scalar_select %p94, %s95, %s96
      %p100 = pneg %p94
      %p101 = scmp.eq.s32.totalorder %s17, 1
      %p102 = por %p100, %p101
      %p103 = scmp.ne.s32.totalorder %s95, %s98
      %p104 = scmp.eq.s32.totalorder %s17, 0
      %p105 = por %p103, %p104
      %p106 = scmp.ne.s32.totalorder %s95, %s98
      %p107 = scmp.eq.s32.totalorder %s22, 1
      %p108 = por %p106, %p107
      %p109 = scmp.ne.s32.totalorder %s98, %s99
      %p110 = scmp.eq.s32.totalorder %s22, 0
      %p111 = por %p109, %p110
      %p112 = scmp.ne.s32.totalorder %s98, %s99
      %p113 = scmp.eq.s32.totalorder %s23, 1
      %p114 = por %p112, %p113
      %p116 = scmp.ne.s32.totalorder %s99, %s115
      %p117 = scmp.eq.s32.totalorder %s23, 0
      %p118 = por %p116, %p117
      %p119 = scmp.le.s32.totalorder 1, %s17
      %p120 = scmp.lt.s32.totalorder %s17, 3
      %p121 = pnand %p119, %p120
      %p122 = pneg %p121
      // Predicated region
      $region9: #{tpu_custom_call.1} parent=5 // pred_check
        _
      $region10: #{tpu_custom_call.1} parent=5 // pred_check_branch
        %124 = sbr.rel (%p121) target = $region12
      $region11: #{tpu_custom_call.1} parent=5 // pred_region
        %s125 = ssub.s32 %s17, 1
      $region12: #{tpu_custom_call.1} parent=5 // pred_fallthru
        _
      %p126 = scmp.lt.s32.totalorder %s17, 2
      // Predicated region
      $region13: #{tpu_custom_call.1} parent=5 // pred_check
        %p127 = pneg %p126
      $region14: #{tpu_custom_call.1} parent=5 // pred_check_branch
        %129 = sbr.rel (%p127) target = $region16
      $region15: #{tpu_custom_call.1} parent=5 // pred_region
        // Predicated region
        $region17: #{tpu_custom_call.1} parent=15 // pred_check
          %p130 = pneg %p51
        $region18: #{tpu_custom_call.1} parent=15 // pred_check_branch
          %132 = sbr.rel (%p130) target = $region20
        $region19: #{tpu_custom_call.1} parent=15 // pred_region
          %s133 = sand.u32 %s41, 1
          %s134 = scalar_lea.sflag [#allocation3], %s133
          %s135 = sand.u32 %s41, 1
          %s136 = smul.addr %s135, 16
          %s137 = scalar_lea.vmem [#allocation2], %s136
          %s138 = sadd.s32 %s24, %s25
          %s139 = smul.u32 2, %s138
          %141 = vsyncadd %s134, 0
          %s142 = smul.addr %s139, 8
          %s143 = scalar_lea.hbm %s0, %s142
          %s144 = sshll.u32 %s143, 4
          %s145 = int_to_ptr.hbm [resolvable:$true] %s144
          %s146 = sshll.u32 %s137, 4
          %s147 = int_to_ptr.vmem [resolvable:$true] %s146
          %152 = dma.hbm_to_vmem [thread:$0]  %s145, 256, %s147, %s134, 128, 128, 8
        $region20: #{tpu_custom_call.1} parent=15 // pred_fallthru
          _
        // Predicated region
        $region21: #{tpu_custom_call.1} parent=15 // pred_check
          %p153 = pneg %p79
        $region22: #{tpu_custom_call.1} parent=15 // pred_check_branch
          %155 = sbr.rel (%p153) target = $region24
        $region23: #{tpu_custom_call.1} parent=15 // pred_region
          %s156 = sand.u32 %s69, 1
          %s157 = scalar_lea.sflag [#allocation6], %s156
          %s158 = sand.u32 %s69, 1
          %s159 = smul.addr %s158, 16
          %s160 = scalar_lea.vmem [#allocation5], %s159
          %s161 = sadd.s32 %s24, %s25
          %s162 = smul.u32 2, %s161
          %164 = vsyncadd %s157, 0
          %s165 = smul.addr %s162, 8
          %s166 = scalar_lea.hbm %s1, %s165
          %s167 = sshll.u32 %s166, 4
          %s168 = int_to_ptr.hbm [resolvable:$true] %s167
          %s169 = sshll.u32 %s160, 4
          %s170 = int_to_ptr.vmem [resolvable:$true] %s169
          %175 = dma.hbm_to_vmem [thread:$0]  %s168, 256, %s170, %s157, 128, 128, 8
        $region24: #{tpu_custom_call.1} parent=15 // pred_fallthru
          _
      $region16: #{tpu_custom_call.1} parent=5 // pred_fallthru
        _
      %p176 = scmp.le.s32.totalorder 1, %s17
      %p177 = scmp.lt.s32.totalorder %s17, 3
      %p178 = pnand %p176, %p177
      %p179 = pneg %p178
      // Predicated region
      $region25: #{tpu_custom_call.1} parent=5 // pred_check
        _
      $region26: #{tpu_custom_call.1} parent=5 // pred_check_branch
        %181 = sbr.rel (%p178) target = $region28
      $region27: #{tpu_custom_call.1} parent=5 // pred_region
        %s182 = ssub.s32 %s17, 1
        %s183 = sand.u32 %s44, 1
        %s184 = scalar_lea.sflag [#allocation3], %s183
        %s185 = sand.u32 %s44, 1
        %s186 = smul.addr %s185, 16
        %s187 = scalar_lea.vmem [#allocation2], %s186
        // Predicated region
        $region29: #{tpu_custom_call.1} parent=27 // pred_check
          %p188 = pneg %p57
        $region30: #{tpu_custom_call.1} parent=27 // pred_check_branch
          %190 = sbr.rel (%p188) target = $region32
        $region31: #{tpu_custom_call.1} parent=27 // pred_region
          %192 = dma.done %s184, 256
        $region32: #{tpu_custom_call.1} parent=27 // pred_fallthru
          _
        %s193 = sand.u32 %s72, 1
        %s194 = scalar_lea.sflag [#allocation6], %s193
        %s195 = sand.u32 %s72, 1
        %s196 = smul.addr %s195, 16
        %s197 = scalar_lea.vmem [#allocation5], %s196
        // Predicated region
        $region33: #{tpu_custom_call.1} parent=27 // pred_check
          %p198 = pneg %p85
        $region34: #{tpu_custom_call.1} parent=27 // pred_check_branch
          %200 = sbr.rel (%p198) target = $region36
        $region35: #{tpu_custom_call.1} parent=27 // pred_region
          %202 = dma.done %s194, 256
        $region36: #{tpu_custom_call.1} parent=27 // pred_fallthru
          _
        %s203 = sand.u32 %s44, 1
        %s204 = scalar_lea.sflag [#allocation3], %s203
        %s205 = sand.u32 %s44, 1
        %s206 = smul.addr %s205, 16
        %s207 = scalar_lea.vmem [#allocation2], %s206
        %p208 = pneg %p57
        %p209 = pneg %p54
        %s210 = sand.u32 %s72, 1
        %s211 = scalar_lea.sflag [#allocation6], %s210
        %s212 = sand.u32 %s72, 1
        %s213 = smul.addr %s212, 16
        %s214 = scalar_lea.vmem [#allocation5], %s213
        %p215 = pneg %p85
        %p216 = pneg %p82
        %p217 = pneg %p111
        %p218 = pneg %p108
        %s219 = sand.u32 %s98, 1
        %s220 = scalar_lea.sflag [#allocation4], %s219
        %s221 = sand.u32 %s98, 1
        %s222 = smul.addr %s221, 8
        %s223 = scalar_lea.vmem [#allocation7], %s222
        %s224 = sadd.s32 %s26, %s27
        %s225 = smul.u32 2, %s224
        %s226 = sadd.s32 %s26, %s27
        %s227 = smul.u32 2, %s226
        %p228 = scmp.eq.s32.totalorder %s27, 0
        // Predicated region
        $region37: #{tpu_custom_call.1} parent=27 // pred_check
          %p229 = pneg %p228
        $region38: #{tpu_custom_call.1} parent=27 // pred_check_branch
          %231 = sbr.rel (%p229) target = $region40
        $region39: #{tpu_custom_call.1} parent=27 // pred_region
          %232 = vst [vmem:[%s223] sm:$0xff] 0.0
        $region40: #{tpu_custom_call.1} parent=27 // pred_fallthru
          _
        %v233 = vld [vmem:[%s187] sm:$0xff]
        %v234 = vld [vmem:[%s187 + $0x8] sm:$0xff]
        %v235 = vmax.f32 %v233, 0.0
        %v236 = vmax.f32 %v234, 0.0
        %v237 = vld [vmem:[%s197] sm:$0xff]
        %v238 = vld [vmem:[%s197 + $0x8] sm:$0xff]
        %v239 = vadd.f32 %v235, 1.0
        %v240 = vlog2.pop %v239
        %v241 = vmul.f32 %v240, 0.6931472
        %v242 = vmul.f32 -0.5, %v235
        %v243 = vadd.f32 %v242, 1.0
        %v244 = vmul.f32 %v243, %v235
        %v245 = vand.u32 2147483647, %v235
        %vm246 = vcmp.lt.f32.partialorder %v245, 0.0004427343
        %v247 = vsel %vm246, %v244, %v241
        %v248 = vadd.f32 %v236, 1.0
        %v249 = vlog2.pop %v248
        %v250 = vmul.f32 %v249, 0.6931472
        %v251 = vmul.f32 -0.5, %v236
        %v252 = vadd.f32 %v251, 1.0
        %v253 = vmul.f32 %v252, %v236
        %v254 = vand.u32 2147483647, %v236
        %vm255 = vcmp.lt.f32.partialorder %v254, 0.0004427343
        %v256 = vsel %vm255, %v253, %v250
        %v257 = vadd.f32 %v237, 1.0
        %v258 = vlog2.pop %v257
        %v259 = vmul.f32 %v258, 0.6931472
        %v260 = vmul.f32 -0.5, %v237
        %v261 = vadd.f32 %v260, 1.0
        %v262 = vmul.f32 %v261, %v237
        %v263 = vand.u32 2147483647, %v237
        %vm264 = vcmp.lt.f32.partialorder %v263, 0.0004427343
        %v265 = vsel %vm264, %v262, %v259
        %v266 = vadd.f32 %v238, 1.0
        %v267 = vlog2.pop %v266
        %v268 = vmul.f32 %v267, 0.6931472
        %v269 = vmul.f32 -0.5, %v238
        %v270 = vadd.f32 %v269, 1.0
        %v271 = vmul.f32 %v270, %v238
        %v272 = vand.u32 2147483647, %v238
        %vm273 = vcmp.lt.f32.partialorder %v272, 0.0004427343
        %v274 = vsel %vm273, %v271, %v268
        %v275 = vsub.f32 %v247, %v265
        %v276 = vsub.f32 %v256, %v274
        %v277 = vmul.f32 %v275, %v275
        %v278 = vmul.f32 %v276, %v276
        %v279 = vld [vmem:[%s223] sm:$0xff]
        %v280 = vadd.f32 %v277, %v278
        %v281 = vadd.f32 %v279, %v280
        %282 = vst [vmem:[%s223] sm:$0xff] %v281
        %s283 = sand.u32 %s98, 1
        %s284 = scalar_lea.sflag [#allocation4], %s283
        %s285 = sand.u32 %s98, 1
        %s286 = smul.addr %s285, 8
        %s287 = scalar_lea.vmem [#allocation7], %s286
        // Predicated region
        $region41: #{tpu_custom_call.1} parent=27 // pred_check
          %p288 = pneg %p108
        $region42: #{tpu_custom_call.1} parent=27 // pred_check_branch
          %290 = sbr.rel (%p288) target = $region44
        $region43: #{tpu_custom_call.1} parent=27 // pred_region
          %292 = vsyncadd %s284, 0
          %s293 = smul.addr %s26, 8
          %s294 = scalar_lea.hbm %s2, %s293
          %s296 = sshll.u32 %s287, 4
          %s297 = int_to_ptr.vmem [resolvable:$true] %s296
          %s298 = sshll.u32 %s294, 4
          %s299 = int_to_ptr.hbm [resolvable:$true] %s298
          %301 = dma.vmem_to_hbm [thread:$0]  %s297, 128, %s299, %s284
        $region44: #{tpu_custom_call.1} parent=27 // pred_fallthru
          _
      $region28: #{tpu_custom_call.1} parent=5 // pred_fallthru
        _
      %p302 = scmp.le.s32.totalorder 2, %s17
      // Predicated region
      $region45: #{tpu_custom_call.1} parent=5 // pred_check
        %p303 = pneg %p302
      $region46: #{tpu_custom_call.1} parent=5 // pred_check_branch
        %305 = sbr.rel (%p303) target = $region48
      $region47: #{tpu_custom_call.1} parent=5 // pred_region
        %s306 = ssub.s32 %s17, 2
        // Predicated region
        $region49: #{tpu_custom_call.1} parent=47 // pred_check
          %p307 = pneg %p114
        $region50: #{tpu_custom_call.1} parent=47 // pred_check_branch
          %309 = sbr.rel (%p307) target = $region52
        $region51: #{tpu_custom_call.1} parent=47 // pred_region
          %s310 = sand.u32 %s99, 1
          %s311 = scalar_lea.sflag [#allocation4], %s310
          %s312 = sand.u32 %s99, 1
          %s313 = smul.addr %s312, 8
          %s314 = scalar_lea.vmem [#allocation7], %s313
          %316 = dma.done %s311, 128
        $region52: #{tpu_custom_call.1} parent=47 // pred_fallthru
          _
      $region48: #{tpu_custom_call.1} parent=5 // pred_fallthru
        _
    $region6: #{tpu_custom_call.1} parent=1 // loop_footer
      %s21 = sadd.s32 1, %s17
    $region7: #{tpu_custom_call.1} parent=1 // loop_footer_branch
      %16 = sbr.rel target = $region3
    $region8: #{tpu_custom_call.1} parent=1 // loop_exit
      _
    %317 = vsyncpa [#allocation3], 1
    %s318 = scalar_lea.sflag [#allocation3], 1
    %319 = vsyncpa %s318, 1
    %320 = vsyncpa [#allocation6], 1
    %s321 = scalar_lea.sflag [#allocation6], 1
    %322 = vsyncpa %s321, 1
    %323 = vsyncpa [#allocation4], 1
    %s324 = scalar_lea.sflag [#allocation4], 1
    %325 = vsyncpa %s324, 1

</llo_original>
